<compile_context>
chip_gen: v7x
topology: tpu7x:2x2x1
jax: 0.10.0
libtpu: 0.0.40
codegen_flags: <defaults>
</compile_context>

<pallas_src>
import jax
import jax.numpy as jnp
from jax.experimental import pallas as pl
from jax.experimental.pallas import tpu as pltpu

INPUT_SIZE = 100
HIDDEN_SIZE = 256
OUTPUT_SIZE = 28 * 28  # 784

# K dim of fc1 padded to a full lane group inside the kernel (zero-padded, exact).
INPUT_PAD = 128


def _round_up(n, m):
    return (n + m - 1) // m * m


def generator_kernel(x_ref, w1_ref, b1_ref, w2_ref, b2_ref, w3_ref, b3_ref, o_ref):
    cdt = w1_ref.dtype  # compute dtype for MXU inputs (bf16 or f32)

    # Cast + zero-pad x from (tile, 100) to (tile, 128) in-kernel (exact: the
    # padded K rows of w1 are zero).
    x = x_ref[...].astype(cdt)
    pad = jnp.zeros((x.shape[0], INPUT_PAD - INPUT_SIZE), cdt)
    x = jnp.concatenate([x, pad], axis=-1)

    # fc1 + ReLU  (MXU matmul, f32 accumulation)
    h = jnp.dot(x, w1_ref[...], preferred_element_type=jnp.float32)
    h = jnp.maximum(h + b1_ref[...], 0.0).astype(cdt)
    # fc2 + ReLU
    h = jnp.dot(h, w2_ref[...], preferred_element_type=jnp.float32)
    h = jnp.maximum(h + b2_ref[...], 0.0).astype(cdt)
    # fc3 + Tanh  (N = 784 full-dim block; Mosaic masks the last 16 lanes)
    h = jnp.dot(h, w3_ref[...], preferred_element_type=jnp.float32)
    o_ref[...] = jnp.tanh(h + b3_ref[...]).astype(o_ref.dtype)


def prepare_params(params, compute_dtype=jnp.bfloat16):
    """One-time padding/casting of weights (hoisted out of the forward call).
    Weights are stored (in, out). Only fc1's K dim is zero-padded 100 -> 128."""
    w1, b1, w2, b2, w3, b3 = params
    w1_p = jnp.zeros((INPUT_PAD, HIDDEN_SIZE), compute_dtype)
    w1_p = w1_p.at[:INPUT_SIZE, :].set(w1.astype(compute_dtype))
    return (
        w1_p,
        b1.reshape(1, HIDDEN_SIZE).astype(jnp.float32),
        w2.astype(compute_dtype),
        b2.reshape(1, HIDDEN_SIZE).astype(jnp.float32),
        w3.astype(compute_dtype),                      # (256, 784), no N-pad
        b3.reshape(1, OUTPUT_SIZE).astype(jnp.float32),
    )


def _choose_tile(B, batch_tile):
    b8 = _round_up(B, 8)
    tile = min(batch_tile, b8)
    # For large batches that would collapse to a single grid step, split into
    # two steps so the "parallel" axis can shard across v7x's 2 TensorCores.
    if tile == b8 and b8 >= 512:
        tile = _round_up((b8 + 1) // 2, 8)
    return tile


def generator_forward(x, prepared_params, *, batch_tile=1024, out_dtype=None):
    """x: (B, 100) float32 -> (B, 784) in out_dtype (defaults to compute dtype)."""
    w1_p, b1, w2_p, b2, w3_p, b3 = prepared_params
    if out_dtype is None:
        out_dtype = w1_p.dtype
    B = x.shape[0]

    tile = _choose_tile(B, batch_tile)
    B_pad = _round_up(B, tile)
    grid = (B_pad // tile,)

    # Only pad batch rows when B is ragged w.r.t. the tile (values exact; the
    # padded rows are computed and sliced off afterwards).
    if B_pad != B:
        x_in = jnp.zeros((B_pad, INPUT_SIZE), x.dtype).at[:B, :].set(x)
    else:
        x_in = x

    # Grid-invariant full blocks for weights/biases (resident in VMEM).
    full = lambda shape: pl.BlockSpec(shape, lambda i: (0, 0))

    out = pl.pallas_call(
        generator_kernel,
        out_shape=jax.ShapeDtypeStruct((B_pad, OUTPUT_SIZE), out_dtype),
        grid_spec=pltpu.PrefetchScalarGridSpec(
            num_scalar_prefetch=0,
            grid=grid,
            in_specs=[
                pl.BlockSpec((tile, INPUT_SIZE), lambda i: (i, 0)),  # x (unpadded)
                full((INPUT_PAD, HIDDEN_SIZE)),     # w1 (K padded to 128)
                full((1, HIDDEN_SIZE)),             # b1 (f32)
                full((HIDDEN_SIZE, HIDDEN_SIZE)),   # w2
                full((1, HIDDEN_SIZE)),             # b2 (f32)
                full((HIDDEN_SIZE, OUTPUT_SIZE)),   # w3 (N = 784, full dim)
                full((1, OUTPUT_SIZE)),             # b3 (f32)
            ],
            out_specs=pl.BlockSpec((tile, OUTPUT_SIZE), lambda i: (i, 0)),
        ),
        compiler_params=pltpu.CompilerParams(
            dimension_semantics=("parallel",),
            vmem_limit_bytes=48 * 1024 * 1024,
        ),
    )(x_in, w1_p, b1, w2_p, b2, w3_p, b3)

    if B_pad != B:
        out = out[:B]
    return out


def init_params(key):
    """Deterministic init matching PyTorch nn.Linear default:
    U(-1/sqrt(fan_in), 1/sqrt(fan_in)). Weights stored as (in, out), f32."""
    def linear(key, fan_in, fan_out):
        kw, kb = jax.random.split(key)
        bound = 1.0 / jnp.sqrt(fan_in)
        w = jax.random.uniform(kw, (fan_in, fan_out), jnp.float32, -bound, bound)
        b = jax.random.uniform(kb, (1, fan_out), jnp.float32, -bound, bound)
        return w, b

    k1, k2, k3 = jax.random.split(key, 3)
    w1, b1 = linear(k1, INPUT_SIZE, HIDDEN_SIZE)
    w2, b2 = linear(k2, HIDDEN_SIZE, HIDDEN_SIZE)
    w3, b3 = linear(k3, HIDDEN_SIZE, OUTPUT_SIZE)
    return (w1, b1, w2, b2, w3, b3)


def reference_forward(x, params):
    w1, b1, w2, b2, w3, b3 = params
    h = jnp.maximum(x @ w1 + b1, 0.0)
    h = jnp.maximum(h @ w2 + b2, 0.0)
    return jnp.tanh(h @ w3 + b3)


if __name__ == "__main__":
    key = jax.random.PRNGKey(0)
    k_params, k_x = jax.random.split(key)
    params = init_params(k_params)

    # One-time prepared (padded / cast) weights, reused across calls.
    prep_bf16 = prepare_params(params, jnp.bfloat16)
    prep_f32 = prepare_params(params, jnp.float32)

    batch = 8
    x = jax.random.normal(k_x, (batch, INPUT_SIZE), dtype=jnp.float32)
    ref = reference_forward(x, params)  # f32 reference

    # Default fast path: bf16 matmul inputs + bf16 output (f32 accumulation).
    out = jax.block_until_ready(generator_forward(x, prep_bf16))
    assert out.shape == (batch, OUTPUT_SIZE), out.shape
    assert out.dtype == jnp.bfloat16, out.dtype
    assert jnp.allclose(out.astype(jnp.float32), ref, atol=2e-2, rtol=2e-2), \
        "bf16 mismatch vs JAX reference"

    # Exact-precision path (f32 compute, f32 output).
    out_f32 = jax.block_until_ready(
        generator_forward(x, prep_f32, out_dtype=jnp.float32))
    assert jnp.allclose(out_f32, ref, atol=1e-5, rtol=1e-5), "f32 mismatch"

    # Ragged batch exercises the row-padding + slice path.
    x_odd = jax.random.normal(jax.random.PRNGKey(1), (13, INPUT_SIZE), jnp.float32)
    out_odd = jax.block_until_ready(generator_forward(x_odd, prep_bf16))
    ref_odd = reference_forward(x_odd, params)
    assert out_odd.shape == (13, OUTPUT_SIZE)
    assert jnp.allclose(out_odd.astype(jnp.float32), ref_odd, atol=2e-2, rtol=2e-2), \
        "ragged-batch mismatch vs JAX reference"

    print("KERNEL_OK")
</pallas_src>

<mosaic_0001>
module attributes {stable_mosaic.version = 11 : i64} {
  func.func @generator_kernel(%arg0: i32, %arg1: memref<8x100xf32, #tpu.memory_space<vmem>>, %arg2: memref<128x256xbf16, #tpu.memory_space<vmem>>, %arg3: memref<1x256xf32, #tpu.memory_space<vmem>>, %arg4: memref<256x256xbf16, #tpu.memory_space<vmem>>, %arg5: memref<1x256xf32, #tpu.memory_space<vmem>>, %arg6: memref<256x784xbf16, #tpu.memory_space<vmem>>, %arg7: memref<1x784xf32, #tpu.memory_space<vmem>>, %arg8: memref<8x784xbf16, #tpu.memory_space<vmem>>) attributes {dimension_semantics = [#tpu.dimension_semantics<parallel>], iteration_bounds = array<i64: 1>, scalar_prefetch = 0 : i64, scratch_operands = 0 : i64, tpu.core_type = #tpu.core_type<tc>, window_params = [{transform_indices = @transform_0, window_bounds = array<i64: 8, 100>}, {pipeline_mode = #tpu.pipeline_mode<synchronous>, transform_indices = @transform_1, window_bounds = array<i64: 128, 256>}, {pipeline_mode = #tpu.pipeline_mode<synchronous>, transform_indices = @transform_2, window_bounds = array<i64: 1, 256>}, {pipeline_mode = #tpu.pipeline_mode<synchronous>, transform_indices = @transform_3, window_bounds = array<i64: 256, 256>}, {pipeline_mode = #tpu.pipeline_mode<synchronous>, transform_indices = @transform_4, window_bounds = array<i64: 1, 256>}, {pipeline_mode = #tpu.pipeline_mode<synchronous>, transform_indices = @transform_5, window_bounds = array<i64: 256, 784>}, {pipeline_mode = #tpu.pipeline_mode<synchronous>, transform_indices = @transform_6, window_bounds = array<i64: 1, 784>}, {transform_indices = @transform_7, window_bounds = array<i64: 8, 784>}]} {
    %c0 = arith.constant 0 : index
    %c0_0 = arith.constant 0 : index
    %0 = vector.load %arg1[%c0, %c0_0] : memref<8x100xf32, #tpu.memory_space<vmem>>, vector<8x100xf32>
    %1 = arith.truncf %0 : vector<8x100xf32> to vector<8x100xbf16>
    %cst = arith.constant 0.000000e+00 : bf16
    %2 = vector.broadcast %cst : bf16 to vector<8x28xbf16>
    %3 = tpu.concatenate %1, %2 in 1 : vector<8x100xbf16>, vector<8x28xbf16> -> vector<8x128xbf16>
    %c0_1 = arith.constant 0 : index
    %c0_2 = arith.constant 0 : index
    %4 = vector.load %arg2[%c0_1, %c0_2] : memref<128x256xbf16, #tpu.memory_space<vmem>>, vector<128x256xbf16>
    %cst_3 = arith.constant dense<0.000000e+00> : vector<8x256xf32>
    %5 = tpu.matmul %3, %4, %cst_3 {dimension_numbers = #tpu.dot_dimension_numbers<[1], [0], [0], [1], [0, 0, 1, 1], [], []>} : vector<8x128xbf16>, vector<128x256xbf16>, vector<8x256xf32> -> vector<8x256xf32>
    %c0_4 = arith.constant 0 : index
    %c0_5 = arith.constant 0 : index
    %6 = vector.load %arg3[%c0_4, %c0_5] : memref<1x256xf32, #tpu.memory_space<vmem>>, vector<1x256xf32>
    %7 = vector.broadcast %6 : vector<1x256xf32> to vector<8x256xf32>
    %8 = arith.addf %5, %7 : vector<8x256xf32>
    %cst_6 = arith.constant 0.000000e+00 : f32
    %9 = vector.broadcast %cst_6 : f32 to vector<8x256xf32>
    %10 = arith.maximumf %8, %9 : vector<8x256xf32>
    %11 = arith.truncf %10 : vector<8x256xf32> to vector<8x256xbf16>
    %c0_7 = arith.constant 0 : index
    %c0_8 = arith.constant 0 : index
    %12 = vector.load %arg4[%c0_7, %c0_8] : memref<256x256xbf16, #tpu.memory_space<vmem>>, vector<256x256xbf16>
    %cst_9 = arith.constant dense<0.000000e+00> : vector<8x256xf32>
    %13 = tpu.matmul %11, %12, %cst_9 {dimension_numbers = #tpu.dot_dimension_numbers<[1], [0], [0], [1], [0, 0, 1, 1], [], []>} : vector<8x256xbf16>, vector<256x256xbf16>, vector<8x256xf32> -> vector<8x256xf32>
    %c0_10 = arith.constant 0 : index
    %c0_11 = arith.constant 0 : index
    %14 = vector.load %arg5[%c0_10, %c0_11] : memref<1x256xf32, #tpu.memory_space<vmem>>, vector<1x256xf32>
    %15 = vector.broadcast %14 : vector<1x256xf32> to vector<8x256xf32>
    %16 = arith.addf %13, %15 : vector<8x256xf32>
    %cst_12 = arith.constant 0.000000e+00 : f32
    %17 = vector.broadcast %cst_12 : f32 to vector<8x256xf32>
    %18 = arith.maximumf %16, %17 : vector<8x256xf32>
    %19 = arith.truncf %18 : vector<8x256xf32> to vector<8x256xbf16>
    %c0_13 = arith.constant 0 : index
    %c0_14 = arith.constant 0 : index
    %20 = vector.load %arg6[%c0_13, %c0_14] : memref<256x784xbf16, #tpu.memory_space<vmem>>, vector<256x784xbf16>
    %cst_15 = arith.constant dense<0.000000e+00> : vector<8x784xf32>
    %21 = tpu.matmul %19, %20, %cst_15 {dimension_numbers = #tpu.dot_dimension_numbers<[1], [0], [0], [1], [0, 0, 1, 1], [], []>} : vector<8x256xbf16>, vector<256x784xbf16>, vector<8x784xf32> -> vector<8x784xf32>
    %c0_16 = arith.constant 0 : index
    %c0_17 = arith.constant 0 : index
    %22 = vector.load %arg7[%c0_16, %c0_17] : memref<1x784xf32, #tpu.memory_space<vmem>>, vector<1x784xf32>
    %23 = vector.broadcast %22 : vector<1x784xf32> to vector<8x784xf32>
    %24 = arith.addf %21, %23 : vector<8x784xf32>
    %25 = math.tanh %24 : vector<8x784xf32>
    %26 = arith.truncf %25 : vector<8x784xf32> to vector<8x784xbf16>
    %c0_18 = arith.constant 0 : index
    %c0_19 = arith.constant 0 : index
    %27 = vector.load %arg8[%c0_18, %c0_19] : memref<8x784xbf16, #tpu.memory_space<vmem>>, vector<8x784xbf16>
    tpu.vector_store %arg8[%c0_18, %c0_19], %26 {strides = array<i32>} : memref<8x784xbf16, #tpu.memory_space<vmem>>, vector<8x784xbf16>,
    return
  }
  func.func @transform_0(%arg0: i32) -> (i32, i32) {
    %c0_i32 = arith.constant 0 : i32
    %c0_i32_0 = arith.constant 0 : i32
    return %arg0, %c0_i32 : i32, i32
  }
  func.func @transform_1(%arg0: i32) -> (i32, i32) {
    %c0_i32 = arith.constant 0 : i32
    %c0_i32_0 = arith.constant 0 : i32
    %c0_i32_1 = arith.constant 0 : i32
    return %c0_i32, %c0_i32_0 : i32, i32
  }
  func.func @transform_2(%arg0: i32) -> (i32, i32) {
    %c0_i32 = arith.constant 0 : i32
    %c0_i32_0 = arith.constant 0 : i32
    %c0_i32_1 = arith.constant 0 : i32
    return %c0_i32, %c0_i32_0 : i32, i32
  }
  func.func @transform_3(%arg0: i32) -> (i32, i32) {
    %c0_i32 = arith.constant 0 : i32
    %c0_i32_0 = arith.constant 0 : i32
    %c0_i32_1 = arith.constant 0 : i32
    return %c0_i32, %c0_i32_0 : i32, i32
  }
  func.func @transform_4(%arg0: i32) -> (i32, i32) {
    %c0_i32 = arith.constant 0 : i32
    %c0_i32_0 = arith.constant 0 : i32
    %c0_i32_1 = arith.constant 0 : i32
    return %c0_i32, %c0_i32_0 : i32, i32
  }
  func.func @transform_5(%arg0: i32) -> (i32, i32) {
    %c0_i32 = arith.constant 0 : i32
    %c0_i32_0 = arith.constant 0 : i32
    %c0_i32_1 = arith.constant 0 : i32
    return %c0_i32, %c0_i32_0 : i32, i32
  }
  func.func @transform_6(%arg0: i32) -> (i32, i32) {
    %c0_i32 = arith.constant 0 : i32
    %c0_i32_0 = arith.constant 0 : i32
    %c0_i32_1 = arith.constant 0 : i32
    return %c0_i32, %c0_i32_0 : i32, i32
  }
  func.func @transform_7(%arg0: i32) -> (i32, i32) {
    %c0_i32 = arith.constant 0 : i32
    %c0_i32_0 = arith.constant 0 : i32
    return %arg0, %c0_i32 : i32, i32
  }
}

</mosaic_0001>

<llo_original>
// kernel: tpu_custom_call.1
$region0: #{tpu_custom_call.1}
  #allocation0 [shape = 'u32[]', space=smem, size = 0x4, offset = 0x4, fixed_abs, tag = 'smem constant byte address 0x4 - core index']
  #allocation1 [shape = 'u32[144,128]{1,0:T(1,128)}', space=vmem, size = 0x12000, scoped, tag = 'internal scratch']
  %s0 = inlined_call_operand.vmem [shape: f32[8,100], index: 0, kind: input, shape index: {}]
  %s1 = inlined_call_operand.vmem [shape: bf16[128,256], index: 1, kind: input, shape index: {}]
  %s2 = inlined_call_operand.vmem [shape: f32[1,256], index: 2, kind: input, shape index: {}]
  %s3 = inlined_call_operand.vmem [shape: bf16[256,256], index: 3, kind: input, shape index: {}]
  %s4 = inlined_call_operand.vmem [shape: f32[1,256], index: 4, kind: input, shape index: {}]
  %s5 = inlined_call_operand.vmem [shape: bf16[256,784], index: 5, kind: input, shape index: {}]
  %s6 = inlined_call_operand.vmem [shape: f32[1,784], index: 6, kind: input, shape index: {}]
  %s7 = inlined_call_operand.hbm [shape: bf16[8,784], index: 7, kind: output, shape index: {}]
  %s8 = sld [smem:[#allocation0]]
  $region38: #{tpu_custom_call.1} parent=0
    _
  %s10 = ssub.s32 1, %s8
  %s11 = scalar_select 0, %s10, %s8
  $region1: #{tpu_custom_call.1} parent=0
    #allocation2 [shape = 'u8[14336]{0}', space=vmem, size = 0x3800, scoped, tag = 'output window, operand 0, single buffered']
    #allocation3 [shape = 's32[1]{0}', space=sflag, size = 0x4, scoped, tag = 'scoped memory for tpu_custom_call.1']
    %12 = vsyncpa [#allocation3], 0
    // Predicated region
    $region2: #{tpu_custom_call.1} parent=1 // pred_check
      _
    $region3: #{tpu_custom_call.1} parent=1 // pred_check_branch
      %14 = sbr.rel (0) target = $region5
    $region4: #{tpu_custom_call.1} parent=1 // pred_region
      _
    $region5: #{tpu_custom_call.1} parent=1 // pred_fallthru
      _
    // Predicated region
    $region6: #{tpu_custom_call.1} parent=1 // pred_check
      _
    $region7: #{tpu_custom_call.1} parent=1 // pred_check_branch
      %16 = sbr.rel (0) target = $region9
    $region8: #{tpu_custom_call.1} parent=1 // pred_region
      _
    $region9: #{tpu_custom_call.1} parent=1 // pred_fallthru
      _
    // Predicated region
    $region10: #{tpu_custom_call.1} parent=1 // pred_check
      _
    $region11: #{tpu_custom_call.1} parent=1 // pred_check_branch
      %18 = sbr.rel (0) target = $region13
    $region12: #{tpu_custom_call.1} parent=1 // pred_region
      _
    $region13: #{tpu_custom_call.1} parent=1 // pred_fallthru
      _
    // Predicated region
    $region14: #{tpu_custom_call.1} parent=1 // pred_check
      _
    $region15: #{tpu_custom_call.1} parent=1 // pred_check_branch
      %20 = sbr.rel (0) target = $region17
    $region16: #{tpu_custom_call.1} parent=1 // pred_region
      _
    $region17: #{tpu_custom_call.1} parent=1 // pred_fallthru
      _
    // Predicated region
    $region18: #{tpu_custom_call.1} parent=1 // pred_check
      _
    $region19: #{tpu_custom_call.1} parent=1 // pred_check_branch
      %22 = sbr.rel (0) target = $region21
    $region20: #{tpu_custom_call.1} parent=1 // pred_region
      _
    $region21: #{tpu_custom_call.1} parent=1 // pred_fallthru
      _
    // Predicated region
    $region22: #{tpu_custom_call.1} parent=1 // pred_check
      _
    $region23: #{tpu_custom_call.1} parent=1 // pred_check_branch
      %24 = sbr.rel (0) target = $region25
    $region24: #{tpu_custom_call.1} parent=1 // pred_region
      _
    $region25: #{tpu_custom_call.1} parent=1 // pred_fallthru
      _
    // Predicated region
    $region26: #{tpu_custom_call.1} parent=1 // pred_check
      _
    $region27: #{tpu_custom_call.1} parent=1 // pred_check_branch
      %26 = sbr.rel (0) target = $region29
    $region28: #{tpu_custom_call.1} parent=1 // pred_region
      _
    $region29: #{tpu_custom_call.1} parent=1 // pred_fallthru
      _
    %v28 = vld [vmem:[%s0] sm:$0xff]
    %v29 = vpack.c.bf16 %v28, %v28
    %vm30 = vcmask 818176
    %v33 = vsel %vm30, %v29, 0
    %v35 = vld [vmem:[%s1] sm:$0xff]
    %v36 = vld [vmem:[%s1 + $0x8] sm:$0xff]
    %v37 = vld [vmem:[%s1 + $0x10] sm:$0xff]
    %v38 = vld [vmem:[%s1 + $0x18] sm:$0xff]
    %v39 = vld [vmem:[%s1 + $0x20] sm:$0xff]
    %v40 = vld [vmem:[%s1 + $0x28] sm:$0xff]
    %v41 = vld [vmem:[%s1 + $0x30] sm:$0xff]
    %v42 = vld [vmem:[%s1 + $0x38] sm:$0xff]
    %v43 = vld [vmem:[%s1 + $0x40] sm:$0xff]
    %v44 = vld [vmem:[%s1 + $0x48] sm:$0xff]
    %v45 = vld [vmem:[%s1 + $0x50] sm:$0xff]
    %v46 = vld [vmem:[%s1 + $0x58] sm:$0xff]
    %v47 = vld [vmem:[%s1 + $0x60] sm:$0xff]
    %v48 = vld [vmem:[%s1 + $0x68] sm:$0xff]
    %v49 = vld [vmem:[%s1 + $0x70] sm:$0xff]
    %v50 = vld [vmem:[%s1 + $0x78] sm:$0xff]
    %v51 = vld [vmem:[%s2] sm:$0x3]
    %v53 = vlaneseq
    %v54 = vshrl.u32 %v53, 7
    %v55 = vsub.s32 0, %v54
    %v56 = vrot.slane %v51, %v55
    %v57 = vlaneseq
    %v58 = vshrl.u32 %v57, 7
    %v59 = vsub.s32 1, %v58
    %v60 = vrot.slane %v51, %v59
    %v79 = vunpack.c.l.b16 %v35
    %v80 = vunpack.c.h.b16 %v35
    %v81 = vunpack.c.l.b16 %v36
    %v82 = vunpack.c.h.b16 %v36
    %v83 = vunpack.c.l.b16 %v37
    %v84 = vunpack.c.h.b16 %v37
    %v85 = vunpack.c.l.b16 %v38
    %v86 = vunpack.c.h.b16 %v38
    %v87 = vunpack.c.l.b16 %v39
    %v88 = vunpack.c.h.b16 %v39
    %v89 = vunpack.c.l.b16 %v40
    %v90 = vunpack.c.h.b16 %v40
    %v91 = vunpack.c.l.b16 %v41
    %v92 = vunpack.c.h.b16 %v41
    %v93 = vunpack.c.l.b16 %v42
    %v94 = vunpack.c.h.b16 %v42
    %v95 = vunpack.c.l.b16 %v43
    %v96 = vunpack.c.h.b16 %v43
    %v97 = vunpack.c.l.b16 %v44
    %v98 = vunpack.c.h.b16 %v44
    %v99 = vunpack.c.l.b16 %v45
    %v100 = vunpack.c.h.b16 %v45
    %v101 = vunpack.c.l.b16 %v46
    %v102 = vunpack.c.h.b16 %v46
    %v103 = vunpack.c.l.b16 %v47
    %v104 = vunpack.c.h.b16 %v47
    %v105 = vunpack.c.l.b16 %v48
    %v106 = vunpack.c.h.b16 %v48
    %v107 = vunpack.c.l.b16 %v49
    %v108 = vunpack.c.h.b16 %v49
    %v109 = vunpack.c.l.b16 %v50
    %v110 = vunpack.c.h.b16 %v50
    %v111 = vpack.c.b16 %v81, %v79
    %v112 = vpack.c.b16 %v82, %v80
    %v113 = vpack.c.b16 %v85, %v83
    %v114 = vpack.c.b16 %v86, %v84
    %v115 = vpack.c.b16 %v89, %v87
    %v116 = vpack.c.b16 %v90, %v88
    %v117 = vpack.c.b16 %v93, %v91
    %v118 = vpack.c.b16 %v94, %v92
    %v119 = vpack.c.b16 %v97, %v95
    %v120 = vpack.c.b16 %v98, %v96
    %v121 = vpack.c.b16 %v101, %v99
    %v122 = vpack.c.b16 %v102, %v100
    %v123 = vpack.c.b16 %v105, %v103
    %v124 = vpack.c.b16 %v106, %v104
    %v125 = vpack.c.b16 %v109, %v107
    %v126 = vpack.c.b16 %v110, %v108
    %143 = vmatprep.subr.bf16.mxu0 %v112
    %144 = vmatpush1.bf16.msra.mxu0 %v111
    %145 = vmatprep.subr.bf16.mxu0 %v114
    %146 = vmatpush1.bf16.msra.mxu0 %v113
    %147 = vmatprep.subr.bf16.mxu0 %v116
    %148 = vmatpush1.bf16.msra.mxu0 %v115
    %149 = vmatprep.subr.bf16.mxu0 %v118
    %150 = vmatpush1.bf16.msra.mxu0 %v117
    %151 = vmatprep.subr.bf16.mxu0 %v120
    %152 = vmatpush1.bf16.msra.mxu0 %v119
    %153 = vmatprep.subr.bf16.mxu0 %v122
    %154 = vmatpush1.bf16.msra.mxu0 %v121
    %155 = vmatprep.subr.bf16.mxu0 %v124
    %156 = vmatpush1.bf16.msra.mxu0 %v123
    %157 = vmatprep.subr.bf16.mxu0 %v126
    %158 = vmatpush1.bf16.msra.mxu0 %v125
    %159 = vmatprep.subr.bf16.mxu0 0
    %160 = vmatpush1.bf16.msra.mxu0 0
    %161 = vmatprep.subr.bf16.mxu0 0
    %162 = vmatpush1.bf16.msra.mxu0 0
    %163 = vmatprep.subr.bf16.mxu0 0
    %164 = vmatpush1.bf16.msra.mxu0 0
    %165 = vmatprep.subr.bf16.mxu0 0
    %166 = vmatpush1.bf16.msra.mxu0 0
    %167 = vmatprep.subr.bf16.mxu0 0
    %168 = vmatpush1.bf16.msra.mxu0 0
    %169 = vmatprep.subr.bf16.mxu0 0
    %170 = vmatpush1.bf16.msra.mxu0 0
    %171 = vmatprep.subr.bf16.mxu0 0
    %172 = vmatpush1.bf16.msra.mxu0 0
    %173 = vmatprep.subr.bf16.mxu0 0
    %174 = vmatpush1.bf16.msra.mxu0 0
    %175 = vmatprep.mubr.bf16.mxu0 0
    %176 = vmatmul.mubr.bf16.gmra.mrb[0].mxu0 %v33
    %v177 = vpop.f32.mrb[0].mxu0
    %v178 = vadd.f32 %v56, %v177
    %v179 = vpop.f32.mrb[0].mxu0
    %v180 = vadd.f32 %v60, %v179
    %v181 = vpop.f32.mrb[0].mxu0
    %v182 = vpop.f32.mrb[0].mxu0
    %183 = vdwg.mxu0
    %v184 = vmax.f32 %v178, 0.0
    %v185 = vmax.f32 %v180, 0.0
    %v186 = vpack.c.bf16 %v184, %v184
    %v187 = vpack.c.bf16 %v185, %v185
    %v188 = vld [vmem:[%s3] sm:$0xff]
    %v189 = vld [vmem:[%s3 + $0x8] sm:$0xff]
    %v190 = vld [vmem:[%s3 + $0x10] sm:$0xff]
    %v191 = vld [vmem:[%s3 + $0x18] sm:$0xff]
    %v192 = vld [vmem:[%s3 + $0x20] sm:$0xff]
    %v193 = vld [vmem:[%s3 + $0x28] sm:$0xff]
    %v194 = vld [vmem:[%s3 + $0x30] sm:$0xff]
    %v195 = vld [vmem:[%s3 + $0x38] sm:$0xff]
    %v196 = vld [vmem:[%s3 + $0x40] sm:$0xff]
    %v197 = vld [vmem:[%s3 + $0x48] sm:$0xff]
    %v198 = vld [vmem:[%s3 + $0x50] sm:$0xff]
    %v199 = vld [vmem:[%s3 + $0x58] sm:$0xff]
    %v200 = vld [vmem:[%s3 + $0x60] sm:$0xff]
    %v201 = vld [vmem:[%s3 + $0x68] sm:$0xff]
    %v202 = vld [vmem:[%s3 + $0x70] sm:$0xff]
    %v203 = vld [vmem:[%s3 + $0x78] sm:$0xff]
    %v204 = vld [vmem:[%s3 + $0x80] sm:$0xff]
    %v205 = vld [vmem:[%s3 + $0x88] sm:$0xff]
    %v206 = vld [vmem:[%s3 + $0x90] sm:$0xff]
    %v207 = vld [vmem:[%s3 + $0x98] sm:$0xff]
    %v208 = vld [vmem:[%s3 + $0xa0] sm:$0xff]
    %v209 = vld [vmem:[%s3 + $0xa8] sm:$0xff]
    %v210 = vld [vmem:[%s3 + $0xb0] sm:$0xff]
    %v211 = vld [vmem:[%s3 + $0xb8] sm:$0xff]
    %v212 = vld [vmem:[%s3 + $0xc0] sm:$0xff]
    %v213 = vld [vmem:[%s3 + $0xc8] sm:$0xff]
    %v214 = vld [vmem:[%s3 + $0xd0] sm:$0xff]
    %v215 = vld [vmem:[%s3 + $0xd8] sm:$0xff]
    %v216 = vld [vmem:[%s3 + $0xe0] sm:$0xff]
    %v217 = vld [vmem:[%s3 + $0xe8] sm:$0xff]
    %v218 = vld [vmem:[%s3 + $0xf0] sm:$0xff]
    %v219 = vld [vmem:[%s3 + $0xf8] sm:$0xff]
    %v220 = vld [vmem:[%s4] sm:$0x3]
    %v222 = vlaneseq
    %v223 = vshrl.u32 %v222, 7
    %v224 = vsub.s32 0, %v223
    %v225 = vrot.slane %v220, %v224
    %v226 = vlaneseq
    %v227 = vshrl.u32 %v226, 7
    %v228 = vsub.s32 1, %v227
    %v229 = vrot.slane %v220, %v228
    %v264 = vunpack.c.l.b16 %v188
    %v265 = vunpack.c.h.b16 %v188
    %v266 = vunpack.c.l.b16 %v189
    %v267 = vunpack.c.h.b16 %v189
    %v268 = vunpack.c.l.b16 %v190
    %v269 = vunpack.c.h.b16 %v190
    %v270 = vunpack.c.l.b16 %v191
    %v271 = vunpack.c.h.b16 %v191
    %v272 = vunpack.c.l.b16 %v192
    %v273 = vunpack.c.h.b16 %v192
    %v274 = vunpack.c.l.b16 %v193
    %v275 = vunpack.c.h.b16 %v193
    %v276 = vunpack.c.l.b16 %v194
    %v277 = vunpack.c.h.b16 %v194
    %v278 = vunpack.c.l.b16 %v195
    %v279 = vunpack.c.h.b16 %v195
    %v280 = vunpack.c.l.b16 %v196
    %v281 = vunpack.c.h.b16 %v196
    %v282 = vunpack.c.l.b16 %v197
    %v283 = vunpack.c.h.b16 %v197
    %v284 = vunpack.c.l.b16 %v198
    %v285 = vunpack.c.h.b16 %v198
    %v286 = vunpack.c.l.b16 %v199
    %v287 = vunpack.c.h.b16 %v199
    %v288 = vunpack.c.l.b16 %v200
    %v289 = vunpack.c.h.b16 %v200
    %v290 = vunpack.c.l.b16 %v201
    %v291 = vunpack.c.h.b16 %v201
    %v292 = vunpack.c.l.b16 %v202
    %v293 = vunpack.c.h.b16 %v202
    %v294 = vunpack.c.l.b16 %v203
    %v295 = vunpack.c.h.b16 %v203
    %v296 = vunpack.c.l.b16 %v204
    %v297 = vunpack.c.h.b16 %v204
    %v298 = vunpack.c.l.b16 %v205
    %v299 = vunpack.c.h.b16 %v205
    %v300 = vunpack.c.l.b16 %v206
    %v301 = vunpack.c.h.b16 %v206
    %v302 = vunpack.c.l.b16 %v207
    %v303 = vunpack.c.h.b16 %v207
    %v304 = vunpack.c.l.b16 %v208
    %v305 = vunpack.c.h.b16 %v208
    %v306 = vunpack.c.l.b16 %v209
    %v307 = vunpack.c.h.b16 %v209
    %v308 = vunpack.c.l.b16 %v210
    %v309 = vunpack.c.h.b16 %v210
    %v310 = vunpack.c.l.b16 %v211
    %v311 = vunpack.c.h.b16 %v211
    %v312 = vunpack.c.l.b16 %v212
    %v313 = vunpack.c.h.b16 %v212
    %v314 = vunpack.c.l.b16 %v213
    %v315 = vunpack.c.h.b16 %v213
    %v316 = vunpack.c.l.b16 %v214
    %v317 = vunpack.c.h.b16 %v214
    %v318 = vunpack.c.l.b16 %v215
    %v319 = vunpack.c.h.b16 %v215
    %v320 = vunpack.c.l.b16 %v216
    %v321 = vunpack.c.h.b16 %v216
    %v322 = vunpack.c.l.b16 %v217
    %v323 = vunpack.c.h.b16 %v217
    %v324 = vunpack.c.l.b16 %v218
    %v325 = vunpack.c.h.b16 %v218
    %v326 = vunpack.c.l.b16 %v219
    %v327 = vunpack.c.h.b16 %v219
    %v328 = vpack.c.b16 %v266, %v264
    %v329 = vpack.c.b16 %v267, %v265
    %v330 = vpack.c.b16 %v270, %v268
    %v331 = vpack.c.b16 %v271, %v269
    %v332 = vpack.c.b16 %v274, %v272
    %v333 = vpack.c.b16 %v275, %v273
    %v334 = vpack.c.b16 %v278, %v276
    %v335 = vpack.c.b16 %v279, %v277
    %v336 = vpack.c.b16 %v282, %v280
    %v337 = vpack.c.b16 %v283, %v281
    %v338 = vpack.c.b16 %v286, %v284
    %v339 = vpack.c.b16 %v287, %v285
    %v340 = vpack.c.b16 %v290, %v288
    %v341 = vpack.c.b16 %v291, %v289
    %v342 = vpack.c.b16 %v294, %v292
    %v343 = vpack.c.b16 %v295, %v293
    %v344 = vpack.c.b16 %v298, %v296
    %v345 = vpack.c.b16 %v299, %v297
    %v346 = vpack.c.b16 %v302, %v300
    %v347 = vpack.c.b16 %v303, %v301
    %v348 = vpack.c.b16 %v306, %v304
    %v349 = vpack.c.b16 %v307, %v305
    %v350 = vpack.c.b16 %v310, %v308
    %v351 = vpack.c.b16 %v311, %v309
    %v352 = vpack.c.b16 %v314, %v312
    %v353 = vpack.c.b16 %v315, %v313
    %v354 = vpack.c.b16 %v318, %v316
    %v355 = vpack.c.b16 %v319, %v317
    %v356 = vpack.c.b16 %v322, %v320
    %v357 = vpack.c.b16 %v323, %v321
    %v358 = vpack.c.b16 %v326, %v324
    %v359 = vpack.c.b16 %v327, %v325
    %392 = vmatprep.subr.bf16.mxu0 %v329
    %393 = vmatpush1.bf16.msra.mxu0 %v328
    %394 = vmatprep.subr.bf16.mxu0 %v331
    %395 = vmatpush1.bf16.msra.mxu0 %v330
    %396 = vmatprep.subr.bf16.mxu0 %v333
    %397 = vmatpush1.bf16.msra.mxu0 %v332
    %398 = vmatprep.subr.bf16.mxu0 %v335
    %399 = vmatpush1.bf16.msra.mxu0 %v334
    %400 = vmatprep.subr.bf16.mxu0 %v337
    %401 = vmatpush1.bf16.msra.mxu0 %v336
    %402 = vmatprep.subr.bf16.mxu0 %v339
    %403 = vmatpush1.bf16.msra.mxu0 %v338
    %404 = vmatprep.subr.bf16.mxu0 %v341
    %405 = vmatpush1.bf16.msra.mxu0 %v340
    %406 = vmatprep.subr.bf16.mxu0 %v343
    %407 = vmatpush1.bf16.msra.mxu0 %v342
    %408 = vmatprep.subr.bf16.mxu0 %v345
    %409 = vmatpush1.bf16.msra.mxu0 %v344
    %410 = vmatprep.subr.bf16.mxu0 %v347
    %411 = vmatpush1.bf16.msra.mxu0 %v346
    %412 = vmatprep.subr.bf16.mxu0 %v349
    %413 = vmatpush1.bf16.msra.mxu0 %v348
    %414 = vmatprep.subr.bf16.mxu0 %v351
    %415 = vmatpush1.bf16.msra.mxu0 %v350
    %416 = vmatprep.subr.bf16.mxu0 %v353
    %417 = vmatpush1.bf16.msra.mxu0 %v352
    %418 = vmatprep.subr.bf16.mxu0 %v355
    %419 = vmatpush1.bf16.msra.mxu0 %v354
    %420 = vmatprep.subr.bf16.mxu0 %v357
    %421 = vmatpush1.bf16.msra.mxu0 %v356
    %422 = vmatprep.subr.bf16.mxu0 %v359
    %423 = vmatpush1.bf16.msra.mxu0 %v358
    %424 = vmatprep.mubr.bf16.mxu0 %v187
    %425 = vmatmul.mubr.bf16.gmra.mrb[0].mxu0 %v186
    %v426 = vpop.f32.mrb[0].mxu0
    %v427 = vadd.f32 %v225, %v426
    %v428 = vpop.f32.mrb[0].mxu0
    %v429 = vadd.f32 %v229, %v428
    %v430 = vpop.f32.mrb[0].mxu0
    %v431 = vpop.f32.mrb[0].mxu0
    %432 = vdwg.mxu0
    %v433 = vmax.f32 %v427, 0.0
    %v434 = vmax.f32 %v429, 0.0
    %v435 = vpack.c.bf16 %v433, %v433
    %v436 = vpack.c.bf16 %v434, %v434
    %v437 = vld [vmem:[%s5] sm:$0xff]
    %v438 = vld [vmem:[%s5 + $0x8] sm:$0xff]
    %v439 = vld [vmem:[%s5 + $0x10] sm:$0xff]
    %v440 = vld [vmem:[%s5 + $0x18] sm:$0xf]
    %v441 = vld [vmem:[%s5 + $0x1c] sm:$0xff]
    %v442 = vld [vmem:[%s5 + $0x24] sm:$0xff]
    %v443 = vld [vmem:[%s5 + $0x2c] sm:$0xff]
    %v444 = vld [vmem:[%s5 + $0x34] sm:$0xf]
    %v445 = vld [vmem:[%s5 + $0x38] sm:$0xff]
    %v446 = vld [vmem:[%s5 + $0x40] sm:$0xff]
    %v447 = vld [vmem:[%s5 + $0x48] sm:$0xff]
    %v448 = vld [vmem:[%s5 + $0x50] sm:$0xf]
    %v449 = vld [vmem:[%s5 + $0x54] sm:$0xff]
    %v450 = vld [vmem:[%s5 + $0x5c] sm:$0xff]
    %v451 = vld [vmem:[%s5 + $0x64] sm:$0xff]
    %v452 = vld [vmem:[%s5 + $0x6c] sm:$0xf]
    %v453 = vld [vmem:[%s5 + $0x70] sm:$0xff]
    %v454 = vld [vmem:[%s5 + $0x78] sm:$0xff]
    %v455 = vld [vmem:[%s5 + $0x80] sm:$0xff]
    %v456 = vld [vmem:[%s5 + $0x88] sm:$0xf]
    %v457 = vld [vmem:[%s5 + $0x8c] sm:$0xff]
    %v458 = vld [vmem:[%s5 + $0x94] sm:$0xff]
    %v459 = vld [vmem:[%s5 + $0x9c] sm:$0xff]
    %v460 = vld [vmem:[%s5 + $0xa4] sm:$0xf]
    %v461 = vld [vmem:[%s5 + $0xa8] sm:$0xff]
    %v462 = vld [vmem:[%s5 + $0xb0] sm:$0xff]
    %v463 = vld [vmem:[%s5 + $0xb8] sm:$0xff]
    %v464 = vld [vmem:[%s5 + $0xc0] sm:$0xf]
    %v465 = vld [vmem:[%s5 + $0xc4] sm:$0xff]
    %v466 = vld [vmem:[%s5 + $0xcc] sm:$0xff]
    %v467 = vld [vmem:[%s5 + $0xd4] sm:$0xff]
    %v468 = vld [vmem:[%s5 + $0xdc] sm:$0xf]
    %v469 = vld [vmem:[%s5 + $0xe0] sm:$0xff]
    %v470 = vld [vmem:[%s5 + $0xe8] sm:$0xff]
    %v471 = vld [vmem:[%s5 + $0xf0] sm:$0xff]
    %v472 = vld [vmem:[%s5 + $0xf8] sm:$0xf]
    %v473 = vld [vmem:[%s5 + $0xfc] sm:$0xff]
    %v474 = vld [vmem:[%s5 + $0x104] sm:$0xff]
    %v475 = vld [vmem:[%s5 + $0x10c] sm:$0xff]
    %v476 = vld [vmem:[%s5 + $0x114] sm:$0xf]
    %v477 = vld [vmem:[%s5 + $0x118] sm:$0xff]
    %v478 = vld [vmem:[%s5 + $0x120] sm:$0xff]
    %v479 = vld [vmem:[%s5 + $0x128] sm:$0xff]
    %v480 = vld [vmem:[%s5 + $0x130] sm:$0xf]
    %v481 = vld [vmem:[%s5 + $0x134] sm:$0xff]
    %v482 = vld [vmem:[%s5 + $0x13c] sm:$0xff]
    %v483 = vld [vmem:[%s5 + $0x144] sm:$0xff]
    %v484 = vld [vmem:[%s5 + $0x14c] sm:$0xf]
    %v485 = vld [vmem:[%s5 + $0x150] sm:$0xff]
    %v486 = vld [vmem:[%s5 + $0x158] sm:$0xff]
    %v487 = vld [vmem:[%s5 + $0x160] sm:$0xff]
    %v488 = vld [vmem:[%s5 + $0x168] sm:$0xf]
    %v489 = vld [vmem:[%s5 + $0x16c] sm:$0xff]
    %v490 = vld [vmem:[%s5 + $0x174] sm:$0xff]
    %v491 = vld [vmem:[%s5 + $0x17c] sm:$0xff]
    %v492 = vld [vmem:[%s5 + $0x184] sm:$0xf]
    %v493 = vld [vmem:[%s5 + $0x188] sm:$0xff]
    %v494 = vld [vmem:[%s5 + $0x190] sm:$0xff]
    %v495 = vld [vmem:[%s5 + $0x198] sm:$0xff]
    %v496 = vld [vmem:[%s5 + $0x1a0] sm:$0xf]
    %v497 = vld [vmem:[%s5 + $0x1a4] sm:$0xff]
    %v498 = vld [vmem:[%s5 + $0x1ac] sm:$0xff]
    %v499 = vld [vmem:[%s5 + $0x1b4] sm:$0xff]
    %v500 = vld [vmem:[%s5 + $0x1bc] sm:$0xf]
    %v501 = vld [vmem:[%s5 + $0x1c0] sm:$0xff]
    %v502 = vld [vmem:[%s5 + $0x1c8] sm:$0xff]
    %v503 = vld [vmem:[%s5 + $0x1d0] sm:$0xff]
    %v504 = vld [vmem:[%s5 + $0x1d8] sm:$0xf]
    %v505 = vld [vmem:[%s5 + $0x1dc] sm:$0xff]
    %v506 = vld [vmem:[%s5 + $0x1e4] sm:$0xff]
    %v507 = vld [vmem:[%s5 + $0x1ec] sm:$0xff]
    %v508 = vld [vmem:[%s5 + $0x1f4] sm:$0xf]
    %v509 = vld [vmem:[%s5 + $0x1f8] sm:$0xff]
    %v510 = vld [vmem:[%s5 + $0x200] sm:$0xff]
    %v511 = vld [vmem:[%s5 + $0x208] sm:$0xff]
    %v512 = vld [vmem:[%s5 + $0x210] sm:$0xf]
    %v513 = vld [vmem:[%s5 + $0x214] sm:$0xff]
    %v514 = vld [vmem:[%s5 + $0x21c] sm:$0xff]
    %v515 = vld [vmem:[%s5 + $0x224] sm:$0xff]
    %v516 = vld [vmem:[%s5 + $0x22c] sm:$0xf]
    %v517 = vld [vmem:[%s5 + $0x230] sm:$0xff]
    %v518 = vld [vmem:[%s5 + $0x238] sm:$0xff]
    %v519 = vld [vmem:[%s5 + $0x240] sm:$0xff]
    %v520 = vld [vmem:[%s5 + $0x248] sm:$0xf]
    %v521 = vld [vmem:[%s5 + $0x24c] sm:$0xff]
    %v522 = vld [vmem:[%s5 + $0x254] sm:$0xff]
    %v523 = vld [vmem:[%s5 + $0x25c] sm:$0xff]
    %v524 = vld [vmem:[%s5 + $0x264] sm:$0xf]
    %v525 = vld [vmem:[%s5 + $0x268] sm:$0xff]
    %v526 = vld [vmem:[%s5 + $0x270] sm:$0xff]
    %v527 = vld [vmem:[%s5 + $0x278] sm:$0xff]
    %v528 = vld [vmem:[%s5 + $0x280] sm:$0xf]
    %v529 = vld [vmem:[%s5 + $0x284] sm:$0xff]
    %v530 = vld [vmem:[%s5 + $0x28c] sm:$0xff]
    %v531 = vld [vmem:[%s5 + $0x294] sm:$0xff]
    %v532 = vld [vmem:[%s5 + $0x29c] sm:$0xf]
    %v533 = vld [vmem:[%s5 + $0x2a0] sm:$0xff]
    %v534 = vld [vmem:[%s5 + $0x2a8] sm:$0xff]
    %v535 = vld [vmem:[%s5 + $0x2b0] sm:$0xff]
    %v536 = vld [vmem:[%s5 + $0x2b8] sm:$0xf]
    %v537 = vld [vmem:[%s5 + $0x2bc] sm:$0xff]
    %v538 = vld [vmem:[%s5 + $0x2c4] sm:$0xff]
    %v539 = vld [vmem:[%s5 + $0x2cc] sm:$0xff]
    %v540 = vld [vmem:[%s5 + $0x2d4] sm:$0xf]
    %v541 = vld [vmem:[%s5 + $0x2d8] sm:$0xff]
    %v542 = vld [vmem:[%s5 + $0x2e0] sm:$0xff]
    %v543 = vld [vmem:[%s5 + $0x2e8] sm:$0xff]
    %v544 = vld [vmem:[%s5 + $0x2f0] sm:$0xf]
    %v545 = vld [vmem:[%s5 + $0x2f4] sm:$0xff]
    %v546 = vld [vmem:[%s5 + $0x2fc] sm:$0xff]
    %v547 = vld [vmem:[%s5 + $0x304] sm:$0xff]
    %v548 = vld [vmem:[%s5 + $0x30c] sm:$0xf]
    %v549 = vld [vmem:[%s5 + $0x310] sm:$0xff]
    %v550 = vld [vmem:[%s5 + $0x318] sm:$0xff]
    %v551 = vld [vmem:[%s5 + $0x320] sm:$0xff]
    %v552 = vld [vmem:[%s5 + $0x328] sm:$0xf]
    %v553 = vld [vmem:[%s5 + $0x32c] sm:$0xff]
    %v554 = vld [vmem:[%s5 + $0x334] sm:$0xff]
    %v555 = vld [vmem:[%s5 + $0x33c] sm:$0xff]
    %v556 = vld [vmem:[%s5 + $0x344] sm:$0xf]
    %v557 = vld [vmem:[%s5 + $0x348] sm:$0xff]
    %v558 = vld [vmem:[%s5 + $0x350] sm:$0xff]
    %v559 = vld [vmem:[%s5 + $0x358] sm:$0xff]
    %v560 = vld [vmem:[%s5 + $0x360] sm:$0xf]
    %v561 = vld [vmem:[%s5 + $0x364] sm:$0xff]
    %v562 = vld [vmem:[%s5 + $0x36c] sm:$0xff]
    %v563 = vld [vmem:[%s5 + $0x374] sm:$0xff]
    %v564 = vld [vmem:[%s5 + $0x37c] sm:$0xf]
    %v565 = vld [vmem:[%s6] sm:$0x7f]
    %v567 = vlaneseq
    %v568 = vshrl.u32 %v567, 7
    %v569 = vsub.s32 0, %v568
    %v570 = vrot.slane %v565, %v569
    %v571 = vlaneseq
    %v572 = vshrl.u32 %v571, 7
    %v573 = vsub.s32 1, %v572
    %v574 = vrot.slane %v565, %v573
    %v575 = vlaneseq
    %v576 = vshrl.u32 %v575, 7
    %v577 = vsub.s32 2, %v576
    %v578 = vrot.slane %v565, %v577
    %v579 = vlaneseq
    %v580 = vshrl.u32 %v579, 7
    %v581 = vsub.s32 3, %v580
    %v582 = vrot.slane %v565, %v581
    %v583 = vlaneseq
    %v584 = vshrl.u32 %v583, 7
    %v585 = vsub.s32 4, %v584
    %v586 = vrot.slane %v565, %v585
    %v587 = vlaneseq
    %v588 = vshrl.u32 %v587, 7
    %v589 = vsub.s32 5, %v588
    %v590 = vrot.slane %v565, %v589
    %v591 = vlaneseq
    %v592 = vshrl.u32 %v591, 7
    %v593 = vsub.s32 6, %v592
    %v594 = vrot.slane %v565, %v593
    %v730 = vunpack.c.l.b16 %v437
    %v731 = vunpack.c.h.b16 %v437
    %v732 = vunpack.c.l.b16 %v438
    %v733 = vunpack.c.h.b16 %v438
    %v734 = vunpack.c.l.b16 %v439
    %v735 = vunpack.c.h.b16 %v439
    %v736 = vunpack.c.l.b16 %v440
    %v737 = vunpack.c.l.b16 %v441
    %v738 = vunpack.c.h.b16 %v441
    %v739 = vunpack.c.l.b16 %v442
    %v740 = vunpack.c.h.b16 %v442
    %v741 = vunpack.c.l.b16 %v443
    %v742 = vunpack.c.h.b16 %v443
    %v743 = vunpack.c.l.b16 %v444
    %v744 = vunpack.c.l.b16 %v445
    %v745 = vunpack.c.h.b16 %v445
    %v746 = vunpack.c.l.b16 %v446
    %v747 = vunpack.c.h.b16 %v446
    %v748 = vunpack.c.l.b16 %v447
    %v749 = vunpack.c.h.b16 %v447
    %v750 = vunpack.c.l.b16 %v448
    %v751 = vunpack.c.l.b16 %v449
    %v752 = vunpack.c.h.b16 %v449
    %v753 = vunpack.c.l.b16 %v450
    %v754 = vunpack.c.h.b16 %v450
    %v755 = vunpack.c.l.b16 %v451
    %v756 = vunpack.c.h.b16 %v451
    %v757 = vunpack.c.l.b16 %v452
    %v758 = vunpack.c.l.b16 %v453
    %v759 = vunpack.c.h.b16 %v453
    %v760 = vunpack.c.l.b16 %v454
    %v761 = vunpack.c.h.b16 %v454
    %v762 = vunpack.c.l.b16 %v455
    %v763 = vunpack.c.h.b16 %v455
    %v764 = vunpack.c.l.b16 %v456
    %v765 = vunpack.c.l.b16 %v457
    %v766 = vunpack.c.h.b16 %v457
    %v767 = vunpack.c.l.b16 %v458
    %v768 = vunpack.c.h.b16 %v458
    %v769 = vunpack.c.l.b16 %v459
    %v770 = vunpack.c.h.b16 %v459
    %v771 = vunpack.c.l.b16 %v460
    %v772 = vunpack.c.l.b16 %v461
    %v773 = vunpack.c.h.b16 %v461
    %v774 = vunpack.c.l.b16 %v462
    %v775 = vunpack.c.h.b16 %v462
    %v776 = vunpack.c.l.b16 %v463
    %v777 = vunpack.c.h.b16 %v463
    %v778 = vunpack.c.l.b16 %v464
    %v779 = vunpack.c.l.b16 %v465
    %v780 = vunpack.c.h.b16 %v465
    %v781 = vunpack.c.l.b16 %v466
    %v782 = vunpack.c.h.b16 %v466
    %v783 = vunpack.c.l.b16 %v467
    %v784 = vunpack.c.h.b16 %v467
    %v785 = vunpack.c.l.b16 %v468
    %v786 = vunpack.c.l.b16 %v469
    %v787 = vunpack.c.h.b16 %v469
    %v788 = vunpack.c.l.b16 %v470
    %v789 = vunpack.c.h.b16 %v470
    %v790 = vunpack.c.l.b16 %v471
    %v791 = vunpack.c.h.b16 %v471
    %v792 = vunpack.c.l.b16 %v472
    %v793 = vunpack.c.l.b16 %v473
    %v794 = vunpack.c.h.b16 %v473
    %v795 = vunpack.c.l.b16 %v474
    %v796 = vunpack.c.h.b16 %v474
    %v797 = vunpack.c.l.b16 %v475
    %v798 = vunpack.c.h.b16 %v475
    %v799 = vunpack.c.l.b16 %v476
    %v800 = vunpack.c.l.b16 %v477
    %v801 = vunpack.c.h.b16 %v477
    %v802 = vunpack.c.l.b16 %v478
    %v803 = vunpack.c.h.b16 %v478
    %v804 = vunpack.c.l.b16 %v479
    %v805 = vunpack.c.h.b16 %v479
    %v806 = vunpack.c.l.b16 %v480
    %v807 = vunpack.c.l.b16 %v481
    %v808 = vunpack.c.h.b16 %v481
    %v809 = vunpack.c.l.b16 %v482
    %v810 = vunpack.c.h.b16 %v482
    %v811 = vunpack.c.l.b16 %v483
    %v812 = vunpack.c.h.b16 %v483
    %v813 = vunpack.c.l.b16 %v484
    %v814 = vunpack.c.l.b16 %v485
    %v815 = vunpack.c.h.b16 %v485
    %v816 = vunpack.c.l.b16 %v486
    %v817 = vunpack.c.h.b16 %v486
    %v818 = vunpack.c.l.b16 %v487
    %v819 = vunpack.c.h.b16 %v487
    %v820 = vunpack.c.l.b16 %v488
    %v821 = vunpack.c.l.b16 %v489
    %v822 = vunpack.c.h.b16 %v489
    %v823 = vunpack.c.l.b16 %v490
    %v824 = vunpack.c.h.b16 %v490
    %v825 = vunpack.c.l.b16 %v491
    %v826 = vunpack.c.h.b16 %v491
    %v827 = vunpack.c.l.b16 %v492
    %v828 = vunpack.c.l.b16 %v493
    %v829 = vunpack.c.h.b16 %v493
    %v830 = vunpack.c.l.b16 %v494
    %v831 = vunpack.c.h.b16 %v494
    %v832 = vunpack.c.l.b16 %v495
    %v833 = vunpack.c.h.b16 %v495
    %v834 = vunpack.c.l.b16 %v496
    %v835 = vunpack.c.l.b16 %v497
    %v836 = vunpack.c.h.b16 %v497
    %v837 = vunpack.c.l.b16 %v498
    %v838 = vunpack.c.h.b16 %v498
    %v839 = vunpack.c.l.b16 %v499
    %v840 = vunpack.c.h.b16 %v499
    %v841 = vunpack.c.l.b16 %v500
    %v842 = vunpack.c.l.b16 %v501
    %v843 = vunpack.c.h.b16 %v501
    %v844 = vunpack.c.l.b16 %v502
    %v845 = vunpack.c.h.b16 %v502
    %v846 = vunpack.c.l.b16 %v503
    %v847 = vunpack.c.h.b16 %v503
    %v848 = vunpack.c.l.b16 %v504
    %v849 = vunpack.c.l.b16 %v505
    %v850 = vunpack.c.h.b16 %v505
    %v851 = vunpack.c.l.b16 %v506
    %v852 = vunpack.c.h.b16 %v506
    %v853 = vunpack.c.l.b16 %v507
    %v854 = vunpack.c.h.b16 %v507
    %v855 = vunpack.c.l.b16 %v508
    %v856 = vunpack.c.l.b16 %v509
    %v857 = vunpack.c.h.b16 %v509
    %v858 = vunpack.c.l.b16 %v510
    %v859 = vunpack.c.h.b16 %v510
    %v860 = vunpack.c.l.b16 %v511
    %v861 = vunpack.c.h.b16 %v511
    %v862 = vunpack.c.l.b16 %v512
    %v863 = vunpack.c.l.b16 %v513
    %v864 = vunpack.c.h.b16 %v513
    %v865 = vunpack.c.l.b16 %v514
    %v866 = vunpack.c.h.b16 %v514
    %v867 = vunpack.c.l.b16 %v515
    %v868 = vunpack.c.h.b16 %v515
    %v869 = vunpack.c.l.b16 %v516
    %v870 = vunpack.c.l.b16 %v517
    %v871 = vunpack.c.h.b16 %v517
    %v872 = vunpack.c.l.b16 %v518
    %v873 = vunpack.c.h.b16 %v518
    %v874 = vunpack.c.l.b16 %v519
    %v875 = vunpack.c.h.b16 %v519
    %v876 = vunpack.c.l.b16 %v520
    %v877 = vunpack.c.l.b16 %v521
    %v878 = vunpack.c.h.b16 %v521
    %v879 = vunpack.c.l.b16 %v522
    %v880 = vunpack.c.h.b16 %v522
    %v881 = vunpack.c.l.b16 %v523
    %v882 = vunpack.c.h.b16 %v523
    %v883 = vunpack.c.l.b16 %v524
    %v884 = vunpack.c.l.b16 %v525
    %v885 = vunpack.c.h.b16 %v525
    %v886 = vunpack.c.l.b16 %v526
    %v887 = vunpack.c.h.b16 %v526
    %v888 = vunpack.c.l.b16 %v527
    %v889 = vunpack.c.h.b16 %v527
    %v890 = vunpack.c.l.b16 %v528
    %v891 = vunpack.c.l.b16 %v529
    %v892 = vunpack.c.h.b16 %v529
    %v893 = vunpack.c.l.b16 %v530
    %v894 = vunpack.c.h.b16 %v530
    %v895 = vunpack.c.l.b16 %v531
    %v896 = vunpack.c.h.b16 %v531
    %v897 = vunpack.c.l.b16 %v532
    %v898 = vunpack.c.l.b16 %v533
    %v899 = vunpack.c.h.b16 %v533
    %v900 = vunpack.c.l.b16 %v534
    %v901 = vunpack.c.h.b16 %v534
    %v902 = vunpack.c.l.b16 %v535
    %v903 = vunpack.c.h.b16 %v535
    %v904 = vunpack.c.l.b16 %v536
    %v905 = vunpack.c.l.b16 %v537
    %v906 = vunpack.c.h.b16 %v537
    %v907 = vunpack.c.l.b16 %v538
    %v908 = vunpack.c.h.b16 %v538
    %v909 = vunpack.c.l.b16 %v539
    %v910 = vunpack.c.h.b16 %v539
    %v911 = vunpack.c.l.b16 %v540
    %v912 = vunpack.c.l.b16 %v541
    %v913 = vunpack.c.h.b16 %v541
    %v914 = vunpack.c.l.b16 %v542
    %v915 = vunpack.c.h.b16 %v542
    %v916 = vunpack.c.l.b16 %v543
    %v917 = vunpack.c.h.b16 %v543
    %v918 = vunpack.c.l.b16 %v544
    %v919 = vunpack.c.l.b16 %v545
    %v920 = vunpack.c.h.b16 %v545
    %v921 = vunpack.c.l.b16 %v546
    %v922 = vunpack.c.h.b16 %v546
    %v923 = vunpack.c.l.b16 %v547
    %v924 = vunpack.c.h.b16 %v547
    %v925 = vunpack.c.l.b16 %v548
    %v926 = vunpack.c.l.b16 %v549
    %v927 = vunpack.c.h.b16 %v549
    %v928 = vunpack.c.l.b16 %v550
    %v929 = vunpack.c.h.b16 %v550
    %v930 = vunpack.c.l.b16 %v551
    %v931 = vunpack.c.h.b16 %v551
    %v932 = vunpack.c.l.b16 %v552
    %v933 = vunpack.c.l.b16 %v553
    %v934 = vunpack.c.h.b16 %v553
    %v935 = vunpack.c.l.b16 %v554
    %v936 = vunpack.c.h.b16 %v554
    %v937 = vunpack.c.l.b16 %v555
    %v938 = vunpack.c.h.b16 %v555
    %v939 = vunpack.c.l.b16 %v556
    %v940 = vunpack.c.l.b16 %v557
    %v941 = vunpack.c.h.b16 %v557
    %v942 = vunpack.c.l.b16 %v558
    %v943 = vunpack.c.h.b16 %v558
    %v944 = vunpack.c.l.b16 %v559
    %v945 = vunpack.c.h.b16 %v559
    %v946 = vunpack.c.l.b16 %v560
    %v947 = vunpack.c.l.b16 %v561
    %v948 = vunpack.c.h.b16 %v561
    %v949 = vunpack.c.l.b16 %v562
    %v950 = vunpack.c.h.b16 %v562
    %v951 = vunpack.c.l.b16 %v563
    %v952 = vunpack.c.h.b16 %v563
    %v953 = vunpack.c.l.b16 %v564
    %v954 = vpack.c.b16 %v737, %v730
    %v955 = vpack.c.b16 %v738, %v731
    %v956 = vpack.c.b16 %v739, %v732
    %v957 = vpack.c.b16 %v740, %v733
    %v958 = vpack.c.b16 %v741, %v734
    %v959 = vpack.c.b16 %v742, %v735
    %v960 = vpack.c.b16 %v743, %v736
    %v961 = vpack.c.b16 %v751, %v744
    %v962 = vpack.c.b16 %v752, %v745
    %v963 = vpack.c.b16 %v753, %v746
    %v964 = vpack.c.b16 %v754, %v747
    %v965 = vpack.c.b16 %v755, %v748
    %v966 = vpack.c.b16 %v756, %v749
    %v967 = vpack.c.b16 %v757, %v750
    %v968 = vpack.c.b16 %v765, %v758
    %v969 = vpack.c.b16 %v766, %v759
    %v970 = vpack.c.b16 %v767, %v760
    %v971 = vpack.c.b16 %v768, %v761
    %v972 = vpack.c.b16 %v769, %v762
    %v973 = vpack.c.b16 %v770, %v763
    %v974 = vpack.c.b16 %v771, %v764
    %v975 = vpack.c.b16 %v779, %v772
    %v976 = vpack.c.b16 %v780, %v773
    %v977 = vpack.c.b16 %v781, %v774
    %v978 = vpack.c.b16 %v782, %v775
    %v979 = vpack.c.b16 %v783, %v776
    %v980 = vpack.c.b16 %v784, %v777
    %v981 = vpack.c.b16 %v785, %v778
    %v982 = vpack.c.b16 %v793, %v786
    %v983 = vpack.c.b16 %v794, %v787
    %v984 = vpack.c.b16 %v795, %v788
    %v985 = vpack.c.b16 %v796, %v789
    %v986 = vpack.c.b16 %v797, %v790
    %v987 = vpack.c.b16 %v798, %v791
    %v988 = vpack.c.b16 %v799, %v792
    %v989 = vpack.c.b16 %v807, %v800
    %v990 = vpack.c.b16 %v808, %v801
    %v991 = vpack.c.b16 %v809, %v802
    %v992 = vpack.c.b16 %v810, %v803
    %v993 = vpack.c.b16 %v811, %v804
    %v994 = vpack.c.b16 %v812, %v805
    %v995 = vpack.c.b16 %v813, %v806
    %v996 = vpack.c.b16 %v821, %v814
    %v997 = vpack.c.b16 %v822, %v815
    %v998 = vpack.c.b16 %v823, %v816
    %v999 = vpack.c.b16 %v824, %v817
    %v1000 = vpack.c.b16 %v825, %v818
    %v1001 = vpack.c.b16 %v826, %v819
    %v1002 = vpack.c.b16 %v827, %v820
    %v1003 = vpack.c.b16 %v835, %v828
    %v1004 = vpack.c.b16 %v836, %v829
    %v1005 = vpack.c.b16 %v837, %v830
    %v1006 = vpack.c.b16 %v838, %v831
    %v1007 = vpack.c.b16 %v839, %v832
    %v1008 = vpack.c.b16 %v840, %v833
    %v1009 = vpack.c.b16 %v841, %v834
    %v1010 = vpack.c.b16 %v849, %v842
    %v1011 = vpack.c.b16 %v850, %v843
    %v1012 = vpack.c.b16 %v851, %v844
    %v1013 = vpack.c.b16 %v852, %v845
    %v1014 = vpack.c.b16 %v853, %v846
    %v1015 = vpack.c.b16 %v854, %v847
    %v1016 = vpack.c.b16 %v855, %v848
    %v1017 = vpack.c.b16 %v863, %v856
    %v1018 = vpack.c.b16 %v864, %v857
    %v1019 = vpack.c.b16 %v865, %v858
    %v1020 = vpack.c.b16 %v866, %v859
    %v1021 = vpack.c.b16 %v867, %v860
    %v1022 = vpack.c.b16 %v868, %v861
    %v1023 = vpack.c.b16 %v869, %v862
    %v1024 = vpack.c.b16 %v877, %v870
    %v1025 = vpack.c.b16 %v878, %v871
    %v1026 = vpack.c.b16 %v879, %v872
    %v1027 = vpack.c.b16 %v880, %v873
    %v1028 = vpack.c.b16 %v881, %v874
    %v1029 = vpack.c.b16 %v882, %v875
    %v1030 = vpack.c.b16 %v883, %v876
    %v1031 = vpack.c.b16 %v891, %v884
    %v1032 = vpack.c.b16 %v892, %v885
    %v1033 = vpack.c.b16 %v893, %v886
    %v1034 = vpack.c.b16 %v894, %v887
    %v1035 = vpack.c.b16 %v895, %v888
    %v1036 = vpack.c.b16 %v896, %v889
    %v1037 = vpack.c.b16 %v897, %v890
    %v1038 = vpack.c.b16 %v905, %v898
    %v1039 = vpack.c.b16 %v906, %v899
    %v1040 = vpack.c.b16 %v907, %v900
    %v1041 = vpack.c.b16 %v908, %v901
    %v1042 = vpack.c.b16 %v909, %v902
    %v1043 = vpack.c.b16 %v910, %v903
    %v1044 = vpack.c.b16 %v911, %v904
    %v1045 = vpack.c.b16 %v919, %v912
    %v1046 = vpack.c.b16 %v920, %v913
    %v1047 = vpack.c.b16 %v921, %v914
    %v1048 = vpack.c.b16 %v922, %v915
    %v1049 = vpack.c.b16 %v923, %v916
    %v1050 = vpack.c.b16 %v924, %v917
    %v1051 = vpack.c.b16 %v925, %v918
    %v1052 = vpack.c.b16 %v933, %v926
    %v1053 = vpack.c.b16 %v934, %v927
    %v1054 = vpack.c.b16 %v935, %v928
    %v1055 = vpack.c.b16 %v936, %v929
    %v1056 = vpack.c.b16 %v937, %v930
    %v1057 = vpack.c.b16 %v938, %v931
    %v1058 = vpack.c.b16 %v939, %v932
    %v1059 = vpack.c.b16 %v947, %v940
    %v1060 = vpack.c.b16 %v948, %v941
    %v1061 = vpack.c.b16 %v949, %v942
    %v1062 = vpack.c.b16 %v950, %v943
    %v1063 = vpack.c.b16 %v951, %v944
    %v1064 = vpack.c.b16 %v952, %v945
    %v1065 = vpack.c.b16 %v953, %v946
    %1178 = vmatprep.subr.bf16.mxu0 %v955
    %1179 = vmatpush1.bf16.msra.mxu0 %v954
    %1180 = vmatprep.subr.bf16.mxu0 %v962
    %1181 = vmatpush1.bf16.msra.mxu0 %v961
    %1182 = vmatprep.subr.bf16.mxu0 %v969
    %1183 = vmatpush1.bf16.msra.mxu0 %v968
    %1184 = vmatprep.subr.bf16.mxu0 %v976
    %1185 = vmatpush1.bf16.msra.mxu0 %v975
    %1186 = vmatprep.subr.bf16.mxu0 %v983
    %1187 = vmatpush1.bf16.msra.mxu0 %v982
    %1188 = vmatprep.subr.bf16.mxu0 %v990
    %1189 = vmatpush1.bf16.msra.mxu0 %v989
    %1190 = vmatprep.subr.bf16.mxu0 %v997
    %1191 = vmatpush1.bf16.msra.mxu0 %v996
    %1192 = vmatprep.subr.bf16.mxu0 %v1004
    %1193 = vmatpush1.bf16.msra.mxu0 %v1003
    %1194 = vmatprep.subr.bf16.mxu0 %v1011
    %1195 = vmatpush1.bf16.msra.mxu0 %v1010
    %1196 = vmatprep.subr.bf16.mxu0 %v1018
    %1197 = vmatpush1.bf16.msra.mxu0 %v1017
    %1198 = vmatprep.subr.bf16.mxu0 %v1025
    %1199 = vmatpush1.bf16.msra.mxu0 %v1024
    %1200 = vmatprep.subr.bf16.mxu0 %v1032
    %1201 = vmatpush1.bf16.msra.mxu0 %v1031
    %1202 = vmatprep.subr.bf16.mxu0 %v1039
    %1203 = vmatpush1.bf16.msra.mxu0 %v1038
    %1204 = vmatprep.subr.bf16.mxu0 %v1046
    %1205 = vmatpush1.bf16.msra.mxu0 %v1045
    %1206 = vmatprep.subr.bf16.mxu0 %v1053
    %1207 = vmatpush1.bf16.msra.mxu0 %v1052
    %1208 = vmatprep.subr.bf16.mxu0 %v1060
    %1209 = vmatpush1.bf16.msra.mxu0 %v1059
    %1210 = vmatprep.mubr.bf16.mxu0 %v436
    %1211 = vmatmul.mubr.bf16.gmra.mrb[0].mxu0 %v435
    %v1212 = vpop.f32.mrb[0].mxu0
    %v1213 = vadd.f32 %v570, %v1212
    %v1214 = vpop.f32.mrb[0].mxu0
    %v1215 = vadd.f32 %v574, %v1214
    %v1216 = vpop.f32.mrb[0].mxu0
    %v1217 = vpop.f32.mrb[0].mxu0
    %1218 = vdwg.mxu0
    %1219 = vmatprep.subr.bf16.mxu0 %v957
    %1220 = vmatpush1.bf16.msra.mxu0 %v956
    %1221 = vmatprep.subr.bf16.mxu0 %v964
    %1222 = vmatpush1.bf16.msra.mxu0 %v963
    %1223 = vmatprep.subr.bf16.mxu0 %v971
    %1224 = vmatpush1.bf16.msra.mxu0 %v970
    %1225 = vmatprep.subr.bf16.mxu0 %v978
    %1226 = vmatpush1.bf16.msra.mxu0 %v977
    %1227 = vmatprep.subr.bf16.mxu0 %v985
    %1228 = vmatpush1.bf16.msra.mxu0 %v984
    %1229 = vmatprep.subr.bf16.mxu0 %v992
    %1230 = vmatpush1.bf16.msra.mxu0 %v991
    %1231 = vmatprep.subr.bf16.mxu0 %v999
    %1232 = vmatpush1.bf16.msra.mxu0 %v998
    %1233 = vmatprep.subr.bf16.mxu0 %v1006
    %1234 = vmatpush1.bf16.msra.mxu0 %v1005
    %1235 = vmatprep.subr.bf16.mxu0 %v1013
    %1236 = vmatpush1.bf16.msra.mxu0 %v1012
    %1237 = vmatprep.subr.bf16.mxu0 %v1020
    %1238 = vmatpush1.bf16.msra.mxu0 %v1019
    %1239 = vmatprep.subr.bf16.mxu0 %v1027
    %1240 = vmatpush1.bf16.msra.mxu0 %v1026
    %1241 = vmatprep.subr.bf16.mxu0 %v1034
    %1242 = vmatpush1.bf16.msra.mxu0 %v1033
    %1243 = vmatprep.subr.bf16.mxu0 %v1041
    %1244 = vmatpush1.bf16.msra.mxu0 %v1040
    %1245 = vmatprep.subr.bf16.mxu0 %v1048
    %1246 = vmatpush1.bf16.msra.mxu0 %v1047
    %1247 = vmatprep.subr.bf16.mxu0 %v1055
    %1248 = vmatpush1.bf16.msra.mxu0 %v1054
    %1249 = vmatprep.subr.bf16.mxu0 %v1062
    %1250 = vmatpush1.bf16.msra.mxu0 %v1061
    %1251 = vmatprep.mubr.bf16.mxu0 %v436
    %1252 = vmatmul.mubr.bf16.gmra.mrb[0].mxu0 %v435
    %v1253 = vpop.f32.mrb[0].mxu0
    %v1254 = vadd.f32 %v578, %v1253
    %v1255 = vpop.f32.mrb[0].mxu0
    %v1256 = vadd.f32 %v582, %v1255
    %v1257 = vpop.f32.mrb[0].mxu0
    %v1258 = vpop.f32.mrb[0].mxu0
    %1259 = vdwg.mxu0
    %1260 = vmatprep.subr.bf16.mxu0 %v959
    %1261 = vmatpush1.bf16.msra.mxu0 %v958
    %1262 = vmatprep.subr.bf16.mxu0 %v966
    %1263 = vmatpush1.bf16.msra.mxu0 %v965
    %1264 = vmatprep.subr.bf16.mxu0 %v973
    %1265 = vmatpush1.bf16.msra.mxu0 %v972
    %1266 = vmatprep.subr.bf16.mxu0 %v980
    %1267 = vmatpush1.bf16.msra.mxu0 %v979
    %1268 = vmatprep.subr.bf16.mxu0 %v987
    %1269 = vmatpush1.bf16.msra.mxu0 %v986
    %1270 = vmatprep.subr.bf16.mxu0 %v994
    %1271 = vmatpush1.bf16.msra.mxu0 %v993
    %1272 = vmatprep.subr.bf16.mxu0 %v1001
    %1273 = vmatpush1.bf16.msra.mxu0 %v1000
    %1274 = vmatprep.subr.bf16.mxu0 %v1008
    %1275 = vmatpush1.bf16.msra.mxu0 %v1007
    %1276 = vmatprep.subr.bf16.mxu0 %v1015
    %1277 = vmatpush1.bf16.msra.mxu0 %v1014
    %1278 = vmatprep.subr.bf16.mxu0 %v1022
    %1279 = vmatpush1.bf16.msra.mxu0 %v1021
    %1280 = vmatprep.subr.bf16.mxu0 %v1029
    %1281 = vmatpush1.bf16.msra.mxu0 %v1028
    %1282 = vmatprep.subr.bf16.mxu0 %v1036
    %1283 = vmatpush1.bf16.msra.mxu0 %v1035
    %1284 = vmatprep.subr.bf16.mxu0 %v1043
    %1285 = vmatpush1.bf16.msra.mxu0 %v1042
    %1286 = vmatprep.subr.bf16.mxu0 %v1050
    %1287 = vmatpush1.bf16.msra.mxu0 %v1049
    %1288 = vmatprep.subr.bf16.mxu0 %v1057
    %1289 = vmatpush1.bf16.msra.mxu0 %v1056
    %1290 = vmatprep.subr.bf16.mxu0 %v1064
    %1291 = vmatpush1.bf16.msra.mxu0 %v1063
    %1292 = vmatprep.mubr.bf16.mxu0 %v436
    %1293 = vmatmul.mubr.bf16.gmra.mrb[0].mxu0 %v435
    %v1294 = vpop.f32.mrb[0].mxu0
    %v1295 = vadd.f32 %v586, %v1294
    %v1296 = vpop.f32.mrb[0].mxu0
    %v1297 = vadd.f32 %v590, %v1296
    %v1298 = vpop.f32.mrb[0].mxu0
    %v1299 = vpop.f32.mrb[0].mxu0
    %1300 = vdwg.mxu0
    %1301 = vmatprep.subr.bf16.mxu0 0
    %1302 = vmatpush1.bf16.msra.mxu0 %v960
    %1303 = vmatprep.subr.bf16.mxu0 0
    %1304 = vmatpush1.bf16.msra.mxu0 %v967
    %1305 = vmatprep.subr.bf16.mxu0 0
    %1306 = vmatpush1.bf16.msra.mxu0 %v974
    %1307 = vmatprep.subr.bf16.mxu0 0
    %1308 = vmatpush1.bf16.msra.mxu0 %v981
    %1309 = vmatprep.subr.bf16.mxu0 0
    %1310 = vmatpush1.bf16.msra.mxu0 %v988
    %1311 = vmatprep.subr.bf16.mxu0 0
    %1312 = vmatpush1.bf16.msra.mxu0 %v995
    %1313 = vmatprep.subr.bf16.mxu0 0
    %1314 = vmatpush1.bf16.msra.mxu0 %v1002
    %1315 = vmatprep.subr.bf16.mxu0 0
    %1316 = vmatpush1.bf16.msra.mxu0 %v1009
    %1317 = vmatprep.subr.bf16.mxu0 0
    %1318 = vmatpush1.bf16.msra.mxu0 %v1016
    %1319 = vmatprep.subr.bf16.mxu0 0
    %1320 = vmatpush1.bf16.msra.mxu0 %v1023
    %1321 = vmatprep.subr.bf16.mxu0 0
    %1322 = vmatpush1.bf16.msra.mxu0 %v1030
    %1323 = vmatprep.subr.bf16.mxu0 0
    %1324 = vmatpush1.bf16.msra.mxu0 %v1037
    %1325 = vmatprep.subr.bf16.mxu0 0
    %1326 = vmatpush1.bf16.msra.mxu0 %v1044
    %1327 = vmatprep.subr.bf16.mxu0 0
    %1328 = vmatpush1.bf16.msra.mxu0 %v1051
    %1329 = vmatprep.subr.bf16.mxu0 0
    %1330 = vmatpush1.bf16.msra.mxu0 %v1058
    %1331 = vmatprep.subr.bf16.mxu0 0
    %1332 = vmatpush1.bf16.msra.mxu0 %v1065
    %1333 = vmatprep.mubr.bf16.mxu0 %v436
    %1334 = vmatmul.mubr.bf16.gmra.mrb[0].mxu0 %v435
    %v1335 = vpop.f32.mrb[0].mxu0
    %v1336 = vadd.f32 %v594, %v1335
    %v1337 = vpop.f32.mrb[0].mxu0
    %v1338 = vpop.f32.mrb[0].mxu0
    %v1339 = vpop.f32.mrb[0].mxu0
    %1340 = vdwg.mxu0
    %v1341 = vtanh.pop %v1213
    %v1342 = vtanh.pop %v1215
    %v1343 = vtanh.pop %v1254
    %v1344 = vtanh.pop %v1256
    %v1345 = vtanh.pop %v1295
    %v1346 = vtanh.pop %v1297
    %v1347 = vtanh.pop %v1336
    %v1348 = vpack.c.bf16 %v1341, %v1341
    %v1349 = vpack.c.bf16 %v1342, %v1342
    %v1350 = vpack.c.bf16 %v1343, %v1343
    %v1351 = vpack.c.bf16 %v1344, %v1344
    %v1352 = vpack.c.bf16 %v1345, %v1345
    %v1353 = vpack.c.bf16 %v1346, %v1346
    %v1354 = vpack.c.bf16 %v1347, %v1347
    %v1362 = vunpack.c.l.b16 %v1348
    %v1363 = vunpack.c.l.b16 %v1349
    %v1364 = vunpack.c.l.b16 %v1350
    %v1365 = vunpack.c.l.b16 %v1351
    %v1366 = vunpack.c.l.b16 %v1352
    %v1367 = vunpack.c.l.b16 %v1353
    %v1368 = vunpack.c.l.b16 %v1354
    %v1369 = vpack.c.b16 %v1363, %v1362
    %v1370 = vpack.c.b16 %v1365, %v1364
    %v1371 = vpack.c.b16 %v1367, %v1366
    %v1372 = vpack.c.b16 %v1368, %v1368
    %1377 = vst [vmem:[#allocation2] sm:$0xff] %v1369
    %1378 = vst [vmem:[#allocation2 + $0x8] sm:$0xff] %v1370
    %1379 = vst [vmem:[#allocation2 + $0x10] sm:$0xff] %v1371
    %vm1380 = vcmask 125952
    %1381 = vst.msk [vmem:[#allocation2 + $0x18] sm:$0xf] %vm1380, %v1372
    // Predicated region
    $region30: #{tpu_custom_call.1} parent=1 // pred_check
      _
    $region31: #{tpu_custom_call.1} parent=1 // pred_check_branch
      %1383 = sbr.rel (0) target = $region33
    $region32: #{tpu_custom_call.1} parent=1 // pred_region
      %s1385 = ssub.s32 448, 448
      %1386 = vsyncadd [#allocation3], %s1385
      %s1388 = sshll.u32 [#allocation2], 4
      %s1389 = int_to_ptr.vmem [resolvable:$true] %s1388
      %1391 = dma.vmem_to_hbm [thread:$0]  %s1389, 448, %s7, [#allocation3]
    $region33: #{tpu_custom_call.1} parent=1 // pred_fallthru
      _
    // Predicated region
    $region34: #{tpu_custom_call.1} parent=1 // pred_check
      _
    $region35: #{tpu_custom_call.1} parent=1 // pred_check_branch
      %1393 = sbr.rel (0) target = $region37
    $region36: #{tpu_custom_call.1} parent=1 // pred_region
      %1394 = dma.done [#allocation3], 448
    $region37: #{tpu_custom_call.1} parent=1 // pred_fallthru
      _
    %1395 = vsyncpa [#allocation3], 1

</llo_original>
